<compile_context>
chip_gen: v6e
topology: v6e:2x2x1
jax: 0.10.0
libtpu: 0.0.40
codegen_flags: <defaults>
</compile_context>

<pallas_src>
import functools
import math

import jax
import jax.numpy as jnp
from jax.experimental import pallas as pl
from jax.experimental.pallas import tpu as pltpu


def _cdiv(a, b):
    return -(-a // b)


def _round_up(a, b):
    return _cdiv(a, b) * b


def _sum_constraint_kernel(x_ref, s_ref, w_ref, o_ref, *, active_width, target_sum):
    """out[:, :W] = x[:, :W] + w * (T - x[:, :W] @ S); out[:, W:] = x[:, W:].

    x_ref: (TM, feat) caller dtype.
    s_ref: (W, W) f32 0/1 selector: (x @ S)[:, j] = head sum of lane j's logical row,
           broadcast to every lane of that row's segment.
    w_ref: (1, W) f32 normalized weights, zero outside the summed positions.
    o_ref: (TM, feat) caller dtype.
    """
    W = active_width
    x_act = x_ref[:, :W].astype(jnp.float32)
    # Per-(logical-)row head sum on the otherwise-idle MXU.
    ssum = jnp.dot(x_act, s_ref[...], preferred_element_type=jnp.float32)
    out = x_act + w_ref[...] * (jnp.float32(target_sum) - ssum)
    o_ref[:, :W] = out.astype(o_ref.dtype)
    if x_ref.shape[1] > W:
        # Untouched tail columns: straight dtype copy (exact; no f32 round-trip).
        o_ref[:, W:] = x_ref[:, W:]


def sum_constraint(x, weight, *, num_sum_indices=11, target_sum=100, donate=False):
    """Pallas TPU implementation of SumConstraint.forward.

    x:      array of arbitrary ndim with last dim >= num_sum_indices.
    weight: array of shape (num_sum_indices,).
    donate: if True (and the feature dim has an untouched tail), alias the output onto
            (a copy of) x and only DMA the first round_up(k, 128) columns.
    """
    orig_shape = x.shape
    F = int(orig_shape[-1])
    k = int(num_sum_indices)
    if k > F:
        raise ValueError(f"num_sum_indices ({k}) exceeds feature dim ({F})")
    dtype = x.dtype
    M = int(math.prod(orig_shape[:-1]))
    if M == 0 or k == 0:
        return x

    # Hoisted weight normalization (one-time O(k) work).
    w = weight.astype(jnp.float32)
    w_normed = w / (jnp.sum(jnp.abs(w)) + jnp.float32(1e-7))

    x2 = x.reshape(M, F)

    # Lane packing: for narrow feature dims that divide 128, pack 128//F logical rows per
    # 128-lane physical row (free, contiguous reshape) so loads/stores are lane-dense.
    packed = (F < 128) and (128 % F == 0)
    rpp = (128 // F) if packed else 1        # logical rows per packed row
    feat = rpp * F                           # lane width of one physical row
    rows_needed = _cdiv(M, rpp)
    rows = rows_needed if rows_needed >= 8 else 8   # keep the sublane dim >= 8
    total = rows * rpp
    if total != M:
        x2 = jnp.concatenate([x2, jnp.zeros((total - M, F), dtype)], axis=0)
    xk = x2.reshape(rows, feat)

    # Active width: the 128-aligned span that actually changes.
    W = 128 if packed else min(F, _round_up(k, 128))

    # Constant selector matrix S (W, W): S[i, j] = 1 iff source lane i lies in the same
    # F-wide segment as output lane j and is one of the k summed positions.
    lane = jnp.arange(W)
    seg = lane // F
    pos = lane % F
    s_mat = ((seg[:, None] == seg[None, :]) & (pos[:, None] < k)).astype(jnp.float32)

    # Normalized weights, zero-padded within a segment, tiled across segments.
    w_pad = jnp.zeros((F if packed else W,), jnp.float32).at[:k].set(w_normed)
    w_row = jnp.tile(w_pad, rpp if packed else 1).reshape(1, W)

    use_donate = bool(donate) and (W < feat)

    # Tile sizing: double-buffered HBM<->VMEM tiles (caller dtype) plus in-kernel f32
    # temporaries on the active columns only.
    itemsize = jnp.dtype(dtype).itemsize
    io_cols = W if use_donate else feat
    bytes_per_row = 2 * (2 * io_cols) * itemsize + 3 * W * 4
    vmem_budget = 16 * 1024 * 1024
    tm = vmem_budget // bytes_per_row
    tm = max(8, min(4096, (tm // 8) * 8))
    if tm >= rows:
        if rows <= 256:
            tm = rows                              # single full-extent block
        else:
            tm = _round_up(_cdiv(rows, 2), 8)      # >=2 steps so both v7x cores get work
    grid_m = _cdiv(rows, tm)

    kernel = functools.partial(
        _sum_constraint_kernel, active_width=W, target_sum=float(target_sum))

    x_block = (tm, W) if use_donate else (tm, feat)
    io_aliases = {0: 0} if use_donate else {}

    out = pl.pallas_call(
        kernel,
        out_shape=jax.ShapeDtypeStruct((rows, feat), dtype),
        grid_spec=pltpu.PrefetchScalarGridSpec(
            num_scalar_prefetch=0,
            grid=(grid_m,),
            in_specs=[
                pl.BlockSpec(x_block, lambda i: (i, 0)),
                pl.BlockSpec((W, W), lambda i: (0, 0)),   # selector: VMEM-resident
                pl.BlockSpec((1, W), lambda i: (0, 0)),   # weights:  VMEM-resident
            ],
            out_specs=pl.BlockSpec(x_block, lambda i: (i, 0)),
        ),
        input_output_aliases=io_aliases,
        compiler_params=pltpu.CompilerParams(
            dimension_semantics=("parallel",),
            vmem_limit_bytes=32 * 1024 * 1024),
    )(xk, s_mat, w_row)

    out = out.reshape(total, F)
    if total != M:
        out = out[:M]
    return out.reshape(orig_shape)


def sum_constraint_ref(x, weight, *, num_sum_indices=11, target_sum=100):
    """Pure-JAX reference mirroring the PyTorch forward (compute in f32)."""
    w = weight.astype(jnp.float32)
    normed_w = w / (jnp.sum(jnp.abs(w)) + 1e-7)
    xf = x.astype(jnp.float32)
    head = xf[..., :num_sum_indices]
    tail = xf[..., num_sum_indices:]
    s = jnp.sum(head, axis=-1, keepdims=True)
    out = jnp.concatenate([head + normed_w * (target_sum - s), tail], axis=-1)
    return out.astype(x.dtype)


if __name__ == "__main__":
    K, T = 11, 100
    key = jax.random.PRNGKey(0)
    kw, k1, k2, k3 = jax.random.split(key, 4)

    weight = jax.random.normal(kw, (K,), dtype=jnp.float32)

    def run_and_check(x, name, atol, rtol, **kwargs):
        out = jax.block_until_ready(
            sum_constraint(x, weight, num_sum_indices=K, target_sum=T, **kwargs))
        ref = sum_constraint_ref(x, weight, num_sum_indices=K, target_sum=T)
        assert out.shape == x.shape and out.dtype == x.dtype, name
        assert jnp.allclose(out.astype(jnp.float32), ref.astype(jnp.float32),
                            atol=atol, rtol=rtol), f"{name}: mismatch vs reference"
        return out

    # 1) narrow-F packed path (F=16 -> 8 logical rows per 128-lane row), f32
    x1 = jax.random.normal(k1, (2, 4, 16), dtype=jnp.float32)
    run_and_check(x1, "packed_f32_small", atol=1e-2, rtol=1e-3)

    # 2) same data in bf16 (bf16 HBM I/O, f32 in-kernel math)
    run_and_check(x1.astype(jnp.bfloat16), "packed_bf16", atol=2e-1, rtol=5e-2)

    # 3) packed path, multi-tile grid + row padding (M = 299*9 = 2691, not /8)
    x3 = jax.random.normal(k2, (299, 9, 16), dtype=jnp.float32)
    run_and_check(x3, "packed_f32_tiled", atol=1e-2, rtol=1e-3)

    # 4) wide-F general path: f32 math only on the first 128 columns, tail copied
    x4 = jax.random.normal(k3, (4, 8, 256), dtype=jnp.float32)
    run_and_check(x4, "wide_f32", atol=1e-2, rtol=1e-3)

    # 5) donated / in-place variant on the wide-F case (head-only DMA)
    run_and_check(x4, "wide_f32_donated", atol=1e-2, rtol=1e-3, donate=True)

    print("KERNEL_OK")
</pallas_src>

<mosaic_0001>
module attributes {stable_mosaic.version = 11 : i64} {
  func.func @_sum_constraint_kernel(%arg0: i32, %arg1: memref<8x128xf32, #tpu.memory_space<vmem>>, %arg2: memref<128x128xf32, #tpu.memory_space<vmem>>, %arg3: memref<1x128xf32, #tpu.memory_space<vmem>>, %arg4: memref<8x128xf32, #tpu.memory_space<vmem>>) attributes {dimension_semantics = [#tpu.dimension_semantics<parallel>], iteration_bounds = array<i64: 1>, scalar_prefetch = 0 : i64, scratch_operands = 0 : i64, tpu.core_type = #tpu.core_type<tc>, window_params = [{transform_indices = @transform_0, window_bounds = array<i64: 8, 128>}, {pipeline_mode = #tpu.pipeline_mode<synchronous>, transform_indices = @transform_1, window_bounds = array<i64: 128, 128>}, {pipeline_mode = #tpu.pipeline_mode<synchronous>, transform_indices = @transform_2, window_bounds = array<i64: 1, 128>}, {transform_indices = @transform_3, window_bounds = array<i64: 8, 128>}]} {
    %c0 = arith.constant 0 : index
    %c0_0 = arith.constant 0 : index
    %0 = vector.load %arg1[%c0, %c0_0] : memref<8x128xf32, #tpu.memory_space<vmem>>, vector<8x128xf32>
    %c0_1 = arith.constant 0 : index
    %c0_2 = arith.constant 0 : index
    %1 = vector.load %arg2[%c0_1, %c0_2] : memref<128x128xf32, #tpu.memory_space<vmem>>, vector<128x128xf32>
    %cst = arith.constant dense<0.000000e+00> : vector<8x128xf32>
    %2 = tpu.matmul %0, %1, %cst {dimension_numbers = #tpu.dot_dimension_numbers<[1], [0], [0], [1], [0, 0, 1, 1], [], []>} : vector<8x128xf32>, vector<128x128xf32>, vector<8x128xf32> -> vector<8x128xf32>
    %c0_3 = arith.constant 0 : index
    %c0_4 = arith.constant 0 : index
    %3 = vector.load %arg3[%c0_3, %c0_4] : memref<1x128xf32, #tpu.memory_space<vmem>>, vector<1x128xf32>
    %cst_5 = arith.constant 1.000000e+02 : f32
    %4 = vector.broadcast %cst_5 : f32 to vector<8x128xf32>
    %5 = arith.subf %4, %2 : vector<8x128xf32>
    %6 = vector.broadcast %3 : vector<1x128xf32> to vector<8x128xf32>
    %7 = arith.mulf %6, %5 : vector<8x128xf32>
    %8 = arith.addf %0, %7 : vector<8x128xf32>
    %c0_6 = arith.constant 0 : index
    %c0_7 = arith.constant 0 : index
    %9 = vector.load %arg4[%c0_6, %c0_7] : memref<8x128xf32, #tpu.memory_space<vmem>>, vector<8x128xf32>
    tpu.vector_store %arg4[%c0_6, %c0_7], %8 {strides = array<i32>} : memref<8x128xf32, #tpu.memory_space<vmem>>, vector<8x128xf32>,
    return
  }
  func.func @transform_0(%arg0: i32) -> (i32, i32) {
    %c0_i32 = arith.constant 0 : i32
    %c0_i32_0 = arith.constant 0 : i32
    return %arg0, %c0_i32 : i32, i32
  }
  func.func @transform_1(%arg0: i32) -> (i32, i32) {
    %c0_i32 = arith.constant 0 : i32
    %c0_i32_0 = arith.constant 0 : i32
    %c0_i32_1 = arith.constant 0 : i32
    return %c0_i32, %c0_i32_0 : i32, i32
  }
  func.func @transform_2(%arg0: i32) -> (i32, i32) {
    %c0_i32 = arith.constant 0 : i32
    %c0_i32_0 = arith.constant 0 : i32
    %c0_i32_1 = arith.constant 0 : i32
    return %c0_i32, %c0_i32_0 : i32, i32
  }
  func.func @transform_3(%arg0: i32) -> (i32, i32) {
    %c0_i32 = arith.constant 0 : i32
    %c0_i32_0 = arith.constant 0 : i32
    return %arg0, %c0_i32 : i32, i32
  }
}

</mosaic_0001>

<llo_original>
// kernel: tpu_custom_call.1
$region0: #{tpu_custom_call.1}
  #allocation0 [shape = 'u32[]', space=smem, size = 0x4, offset = 0x4, fixed_abs, tag = 'smem constant byte address 0x4 - core index']
  #allocation1 [shape = 'u32[144,128]{1,0:T(1,128)}', space=vmem, size = 0x12000, scoped, tag = 'internal scratch']
  %s0 = inlined_call_operand.hbm [shape: f32[8,128], index: 0, kind: input, shape index: {}]
  %s1 = inlined_call_operand.hbm [shape: f32[128,128], index: 1, kind: input, shape index: {}]
  %s2 = inlined_call_operand.vmem [shape: f32[1,128], index: 2, kind: input, shape index: {}]
  %s3 = inlined_call_operand.hbm [shape: f32[8,128], index: 3, kind: output, shape index: {}]
  %s4 = sld [smem:[#allocation0]]
  $region30: #{tpu_custom_call.1} parent=0
    _
  %s6 = ssub.s32 1, %s4
  %s7 = scalar_select 0, %s6, %s4
  $region1: #{tpu_custom_call.1} parent=0
    #allocation2 [shape = 'u8[4096]{0}', space=vmem, size = 0x1000, scoped, tag = 'input window, operand 0, single buffered']
    #allocation3 [shape = 's32[1]{0}', space=sflag, size = 0x4, scoped, tag = 'scoped memory for tpu_custom_call.1']
    #allocation4 [shape = 's32[1]{0}', space=sflag, size = 0x4, scoped, tag = 'scoped memory for tpu_custom_call.1']
    #allocation5 [shape = 'u8[65536]{0}', space=vmem, size = 0x10000, scoped, tag = 'input window, operand 1, single buffered']
    #allocation6 [shape = 's32[1]{0}', space=sflag, size = 0x4, scoped, tag = 'scoped memory for tpu_custom_call.1']
    #allocation7 [shape = 'u8[4096]{0}', space=vmem, size = 0x1000, scoped, tag = 'output window, operand 0, single buffered']
    %8 = vsyncpa [#allocation3], 0
    %9 = vsyncpa [#allocation6], 0
    %10 = vsyncpa [#allocation4], 0
    // Predicated region
    $region2: #{tpu_custom_call.1} parent=1 // pred_check
      _
    $region3: #{tpu_custom_call.1} parent=1 // pred_check_branch
      %12 = sbr.rel (0) target = $region5
    $region4: #{tpu_custom_call.1} parent=1 // pred_region
      %s14 = ssub.s32 128, 128
      %15 = vsyncadd [#allocation3], %s14
      %s17 = sshll.u32 [#allocation2], 4
      %s18 = int_to_ptr.vmem [resolvable:$true] %s17
      %20 = dma.hbm_to_vmem [thread:$0]  %s0, 128, %s18, [#allocation3]
    $region5: #{tpu_custom_call.1} parent=1 // pred_fallthru
      _
    // Predicated region
    $region6: #{tpu_custom_call.1} parent=1 // pred_check
      _
    $region7: #{tpu_custom_call.1} parent=1 // pred_check_branch
      %22 = sbr.rel (0) target = $region9
    $region8: #{tpu_custom_call.1} parent=1 // pred_region
      %s24 = ssub.s32 2048, 2048
      %25 = vsyncadd [#allocation6], %s24
      %s26 = sshll.u32 [#allocation5], 4
      %s27 = int_to_ptr.vmem [resolvable:$true] %s26
      %32 = dma.hbm_to_vmem [thread:$0]  %s1, 2048, %s27, [#allocation6], 128, 128, 8
    $region9: #{tpu_custom_call.1} parent=1 // pred_fallthru
      _
    // Predicated region
    $region10: #{tpu_custom_call.1} parent=1 // pred_check
      _
    $region11: #{tpu_custom_call.1} parent=1 // pred_check_branch
      %34 = sbr.rel (0) target = $region13
    $region12: #{tpu_custom_call.1} parent=1 // pred_region
      _
    $region13: #{tpu_custom_call.1} parent=1 // pred_fallthru
      _
    // Predicated region
    $region14: #{tpu_custom_call.1} parent=1 // pred_check
      _
    $region15: #{tpu_custom_call.1} parent=1 // pred_check_branch
      %36 = sbr.rel (0) target = $region17
    $region16: #{tpu_custom_call.1} parent=1 // pred_region
      %37 = dma.done [#allocation3], 128
    $region17: #{tpu_custom_call.1} parent=1 // pred_fallthru
      _
    // Predicated region
    $region18: #{tpu_custom_call.1} parent=1 // pred_check
      _
    $region19: #{tpu_custom_call.1} parent=1 // pred_check_branch
      %39 = sbr.rel (0) target = $region21
    $region20: #{tpu_custom_call.1} parent=1 // pred_region
      %40 = dma.done [#allocation6], 2048
    $region21: #{tpu_custom_call.1} parent=1 // pred_fallthru
      _
    %v41 = vld [vmem:[#allocation2] sm:$0xff]
    %v42 = vld [vmem:[#allocation5] sm:$0xff]
    %v43 = vld [vmem:[#allocation5 + $0x8] sm:$0xff]
    %v44 = vld [vmem:[#allocation5 + $0x10] sm:$0xff]
    %v45 = vld [vmem:[#allocation5 + $0x18] sm:$0xff]
    %v46 = vld [vmem:[#allocation5 + $0x20] sm:$0xff]
    %v47 = vld [vmem:[#allocation5 + $0x28] sm:$0xff]
    %v48 = vld [vmem:[#allocation5 + $0x30] sm:$0xff]
    %v49 = vld [vmem:[#allocation5 + $0x38] sm:$0xff]
    %v50 = vld [vmem:[#allocation5 + $0x40] sm:$0xff]
    %v51 = vld [vmem:[#allocation5 + $0x48] sm:$0xff]
    %v52 = vld [vmem:[#allocation5 + $0x50] sm:$0xff]
    %v53 = vld [vmem:[#allocation5 + $0x58] sm:$0xff]
    %v54 = vld [vmem:[#allocation5 + $0x60] sm:$0xff]
    %v55 = vld [vmem:[#allocation5 + $0x68] sm:$0xff]
    %v56 = vld [vmem:[#allocation5 + $0x70] sm:$0xff]
    %v57 = vld [vmem:[#allocation5 + $0x78] sm:$0xff]
    %58 = vmatprep.subr.mxu0 0.0
    %59 = vmatpush1.msra.mxu0 %v57
    %60 = vmatprep.subr.mxu0 0.0
    %61 = vmatpush1.msra.mxu0 %v56
    %62 = vmatprep.subr.mxu0 0.0
    %63 = vmatpush1.msra.mxu0 %v55
    %64 = vmatprep.subr.mxu0 0.0
    %65 = vmatpush1.msra.mxu0 %v54
    %66 = vmatprep.subr.mxu0 0.0
    %67 = vmatpush1.msra.mxu0 %v53
    %68 = vmatprep.subr.mxu0 0.0
    %69 = vmatpush1.msra.mxu0 %v52
    %70 = vmatprep.subr.mxu0 0.0
    %71 = vmatpush1.msra.mxu0 %v51
    %72 = vmatprep.subr.mxu0 0.0
    %73 = vmatpush1.msra.mxu0 %v50
    %74 = vmatprep.subr.mxu0 0.0
    %75 = vmatpush1.msra.mxu0 %v49
    %76 = vmatprep.subr.mxu0 0.0
    %77 = vmatpush1.msra.mxu0 %v48
    %78 = vmatprep.subr.mxu0 0.0
    %79 = vmatpush1.msra.mxu0 %v47
    %80 = vmatprep.subr.mxu0 0.0
    %81 = vmatpush1.msra.mxu0 %v46
    %82 = vmatprep.subr.mxu0 0.0
    %83 = vmatpush1.msra.mxu0 %v45
    %84 = vmatprep.subr.mxu0 0.0
    %85 = vmatpush1.msra.mxu0 %v44
    %86 = vmatprep.subr.mxu0 0.0
    %87 = vmatpush1.msra.mxu0 %v43
    %88 = vmatprep.subr.mxu0 0.0
    %89 = vmatpush1.msra.mxu0 %v42
    %90 = vmatprep.subr.mxu0 0.0
    %91 = vmatpush2.msra.mxu0 0.0
    %92 = vmatprep.subr.mxu0 0.0
    %93 = vmatpush2.msra.mxu0 0.0
    %94 = vmatprep.subr.mxu0 0.0
    %95 = vmatpush2.msra.mxu0 0.0
    %96 = vmatprep.subr.mxu0 0.0
    %97 = vmatpush2.msra.mxu0 0.0
    %98 = vmatprep.subr.mxu0 0.0
    %99 = vmatpush2.msra.mxu0 0.0
    %100 = vmatprep.subr.mxu0 0.0
    %101 = vmatpush2.msra.mxu0 0.0
    %102 = vmatprep.subr.mxu0 0.0
    %103 = vmatpush2.msra.mxu0 0.0
    %104 = vmatprep.subr.mxu0 0.0
    %105 = vmatpush2.msra.mxu0 0.0
    %106 = vmatprep.subr.mxu0 0.0
    %107 = vmatpush2.msra.mxu0 0.0
    %108 = vmatprep.subr.mxu0 0.0
    %109 = vmatpush2.msra.mxu0 0.0
    %110 = vmatprep.subr.mxu0 0.0
    %111 = vmatpush2.msra.mxu0 0.0
    %112 = vmatprep.subr.mxu0 0.0
    %113 = vmatpush2.msra.mxu0 0.0
    %114 = vmatprep.subr.mxu0 0.0
    %115 = vmatpush2.msra.mxu0 0.0
    %116 = vmatprep.subr.mxu0 0.0
    %117 = vmatpush2.msra.mxu0 0.0
    %118 = vmatprep.subr.mxu0 0.0
    %119 = vmatpush2.msra.mxu0 0.0
    %120 = vmatprep.subr.mxu0 0.0
    %121 = vmatpush2.msra.mxu0 0.0
    %122 = vmatprep.mubr.f32.mxu0 0.0
    %123 = vmatmul.mubr.f32.gmra.mxu0 %v41
    %v124 = vpop.f32.mrf.mxu0
    %v125 = vadd.f32 0.0, %v124
    %v126 = vpop.f32.mrf.mxu0
    %127 = vdwg.mxu0
    %v128 = vld [vmem:[%s2] sm:$0x1]
    %v129 = vsub.f32 100.0, %v125
    %v131 = vlaneseq
    %v132 = vshrl.u32 %v131, 7
    %v133 = vsub.s32 0, %v132
    %v134 = vrot.slane %v128, %v133
    %v136 = vmul.f32 %v134, %v129
    %v137 = vadd.f32 %v41, %v136
    %138 = vst [vmem:[#allocation7] sm:$0xff] %v137
    // Predicated region
    $region22: #{tpu_custom_call.1} parent=1 // pred_check
      _
    $region23: #{tpu_custom_call.1} parent=1 // pred_check_branch
      %140 = sbr.rel (0) target = $region25
    $region24: #{tpu_custom_call.1} parent=1 // pred_region
      %s142 = ssub.s32 128, 128
      %143 = vsyncadd [#allocation4], %s142
      %s145 = sshll.u32 [#allocation7], 4
      %s146 = int_to_ptr.vmem [resolvable:$true] %s145
      %148 = dma.vmem_to_hbm [thread:$0]  %s146, 128, %s3, [#allocation4]
    $region25: #{tpu_custom_call.1} parent=1 // pred_fallthru
      _
    // Predicated region
    $region26: #{tpu_custom_call.1} parent=1 // pred_check
      _
    $region27: #{tpu_custom_call.1} parent=1 // pred_check_branch
      %150 = sbr.rel (0) target = $region29
    $region28: #{tpu_custom_call.1} parent=1 // pred_region
      %151 = dma.done [#allocation4], 128
    $region29: #{tpu_custom_call.1} parent=1 // pred_fallthru
      _
    %152 = vsyncpa [#allocation3], 1
    %153 = vsyncpa [#allocation6], 1
    %154 = vsyncpa [#allocation4], 1

</llo_original>
